<compile_context>
chip_gen: v7x
topology: tpu7x:2x2x1
jax: 0.10.0
libtpu: 0.0.40
codegen_flags: <defaults>
</compile_context>

<pallas_src>
import functools

import jax
import jax.numpy as jnp
from jax.experimental import pallas as pl
from jax.experimental.pallas import tpu as pltpu

_LANE = 128


def _matmul_relu_kernel(x_ref, w_ref, o_ref):
    # x: (Bt, IN+1) with a constant-1 last column; w: (IN+1, OUT_pad) whose
    # last row is (bias + other).  One MXU pass with f32 accumulation, ReLU on
    # the VPU, lane-dense store (OUT_pad is a multiple of 128).
    acc = jnp.dot(x_ref[...], w_ref[...], preferred_element_type=jnp.float32)
    o_ref[...] = jnp.maximum(acc, 0.0).astype(o_ref.dtype)


def prepare_params(w, b, other):
    """One-time (init-time) prep: PyTorch Linear params -> augmented weight.

    w: (OUT, IN) PyTorch layout; b: (OUT,); other: scalar (as in the module).
    Returns w_aug of shape (IN+1, OUT_pad): row 0..IN-1 = W^T, last row =
    (b + other), columns zero-padded so OUT_pad is a multiple of 128 lanes.
    """
    OUT, _ = w.shape
    out_pad = ((OUT + _LANE - 1) // _LANE) * _LANE
    # `other` is a scalar in the spec; folding it into the bias is exact.
    bias = b + jnp.asarray(other, dtype=b.dtype)
    w_aug = jnp.concatenate([jnp.transpose(w), bias[None, :]], axis=0)  # (IN+1, OUT)
    w_aug = jnp.pad(w_aug, ((0, 0), (0, out_pad - OUT)))                # lane-dense
    return w_aug


def _call_single_block(x_aug, w_aug, out_dtype):
    # Grid-less call: every operand is a single full VMEM block.
    B = x_aug.shape[0]
    out_pad = w_aug.shape[1]
    vmem = pltpu.MemorySpace.VMEM
    return pl.pallas_call(
        _matmul_relu_kernel,
        out_shape=jax.ShapeDtypeStruct((B, out_pad), out_dtype),
        in_specs=[
            pl.BlockSpec(memory_space=vmem),   # x_aug (B, IN+1)
            pl.BlockSpec(memory_space=vmem),   # w_aug (IN+1, OUT_pad)
        ],
        out_specs=pl.BlockSpec(memory_space=vmem),
    )(x_aug, w_aug)


def _call_batched(x_aug, w_aug, out_dtype, b_tile):
    # 1-D grid over batch tiles; weight block is invariant (stays resident).
    B, inp1 = x_aug.shape
    out_pad = w_aug.shape[1]
    b_padded = ((B + b_tile - 1) // b_tile) * b_tile
    if b_padded != B:
        x_aug = jnp.pad(x_aug, ((0, b_padded - B), (0, 0)))
    out = pl.pallas_call(
        _matmul_relu_kernel,
        out_shape=jax.ShapeDtypeStruct((b_padded, out_pad), out_dtype),
        grid_spec=pltpu.PrefetchScalarGridSpec(
            num_scalar_prefetch=0,
            grid=(b_padded // b_tile,),
            in_specs=[
                pl.BlockSpec((b_tile, inp1), lambda i: (i, 0)),
                pl.BlockSpec((inp1, out_pad), lambda i: (0, 0)),  # resident weight
            ],
            out_specs=pl.BlockSpec((b_tile, out_pad), lambda i: (i, 0)),
        ),
        compiler_params=pltpu.CompilerParams(
            dimension_semantics=("parallel",)),  # shards batch across v7x TCs
    )(x_aug, w_aug)
    return out[:B]


@functools.partial(jax.jit, static_argnames=("out_features", "b_tile"))
def linear_add_relu(x, w_aug, *, out_features, b_tile=256):
    """Forward: relu(x @ W^T + b + other).  x: (B, IN); w_aug from prepare_params."""
    B = x.shape[0]
    # Homogeneous-coordinate column: carries the fused (bias + other) through
    # the matmul, eliminating a third input stream/DMA in the kernel.
    x_aug = jnp.concatenate([x, jnp.ones((B, 1), dtype=x.dtype)], axis=1)
    if B <= b_tile:
        out = _call_single_block(x_aug, w_aug, x.dtype)
    else:
        out = _call_batched(x_aug, w_aug, x.dtype, b_tile)
    return out[:, :out_features]


if __name__ == "__main__":
    key = jax.random.PRNGKey(0)
    k_x, k_w, k_b, k_big = jax.random.split(key, 4)

    B, IN, OUT = 1, 10, 20

    # Deterministic synthetic parameters (nn.Linear(10, 20) shapes).
    x1 = jax.random.normal(k_x, (B, IN), dtype=jnp.float32)
    w = jax.random.normal(k_w, (OUT, IN), dtype=jnp.float32) * 0.1
    b = jax.random.normal(k_b, (OUT,), dtype=jnp.float32) * 0.1
    other = jnp.float32(1.0)   # scalar `other` added in forward

    # One-time parameter prep (outside the per-call hot path).
    w_aug = jax.block_until_ready(prepare_params(w, b, other))

    # Spec-sized call (B=1): grid-less single-block kernel.
    out = jax.block_until_ready(linear_add_relu(x1, w_aug, out_features=OUT))
    ref = jnp.maximum(x1 @ w.T + b[None, :] + other, 0.0)
    assert out.shape == (B, OUT)
    assert jnp.allclose(out, ref, atol=1e-5), "mismatch vs reference (B=1)"

    # Batched call: exercises the 1-D parallel grid path (B not a tile multiple).
    Bb = 300
    xb = jax.random.normal(k_big, (Bb, IN), dtype=jnp.float32)
    outb = jax.block_until_ready(
        linear_add_relu(xb, w_aug, out_features=OUT, b_tile=256))
    refb = jnp.maximum(xb @ w.T + b[None, :] + other, 0.0)
    assert outb.shape == (Bb, OUT)
    assert jnp.allclose(outb, refb, atol=1e-5), "mismatch vs reference (batched)"

    print("KERNEL_OK")
</pallas_src>

<mosaic_0001>
module attributes {stable_mosaic.version = 11 : i64} {
  func.func @_matmul_relu_kernel(%arg0: memref<1x11xf32, #tpu.memory_space<vmem>>, %arg1: memref<11x128xf32, #tpu.memory_space<vmem>>, %arg2: memref<1x128xf32, #tpu.memory_space<vmem>>) attributes {dimension_semantics = [], scalar_prefetch = 0 : i64, scratch_operands = 0 : i64, tpu.core_type = #tpu.core_type<tc>} {
    %c0 = arith.constant 0 : index
    %c0_0 = arith.constant 0 : index
    %0 = vector.load %arg0[%c0, %c0_0] : memref<1x11xf32, #tpu.memory_space<vmem>>, vector<1x11xf32>
    %c0_1 = arith.constant 0 : index
    %c0_2 = arith.constant 0 : index
    %1 = vector.load %arg1[%c0_1, %c0_2] : memref<11x128xf32, #tpu.memory_space<vmem>>, vector<11x128xf32>
    %cst = arith.constant dense<0.000000e+00> : vector<1x128xf32>
    %2 = tpu.matmul %0, %1, %cst {dimension_numbers = #tpu.dot_dimension_numbers<[1], [0], [0], [1], [0, 0, 1, 1], [], []>} : vector<1x11xf32>, vector<11x128xf32>, vector<1x128xf32> -> vector<1x128xf32>
    %cst_3 = arith.constant 0.000000e+00 : f32
    %3 = vector.broadcast %cst_3 : f32 to vector<1x128xf32>
    %4 = arith.maximumf %2, %3 : vector<1x128xf32>
    %c0_4 = arith.constant 0 : index
    %c0_5 = arith.constant 0 : index
    %5 = vector.load %arg2[%c0_4, %c0_5] : memref<1x128xf32, #tpu.memory_space<vmem>>, vector<1x128xf32>
    tpu.vector_store %arg2[%c0_4, %c0_5], %4 {strides = array<i32>} : memref<1x128xf32, #tpu.memory_space<vmem>>, vector<1x128xf32>,
    return
  }
}

</mosaic_0001>

<llo_original>
// kernel: linear_add_relu.1
$region0: #{linear_add_relu.1}
  #allocation0 [shape = 'u32[]', space=smem, size = 0x4, offset = 0x4, fixed_abs, tag = 'smem constant byte address 0x4 - core index']
  #allocation1 [shape = 'u32[144,128]{1,0:T(1,128)}', space=vmem, size = 0x12000, scoped, tag = 'internal scratch']
  %s0 = inlined_call_operand.vmem [shape: f32[1,11], index: 0, kind: input, shape index: {}]
  %s1 = inlined_call_operand.hbm [shape: f32[11,128], index: 1, kind: input, shape index: {}]
  %s2 = inlined_call_operand.hbm [shape: f32[1,128], index: 2, kind: output, shape index: {}]
  %s3 = sld [smem:[#allocation0]]
  $region22: #{linear_add_relu.1} parent=0
    _
  %s5 = ssub.s32 1, %s3
  %s6 = scalar_select 0, %s5, %s3
  $region1: #{linear_add_relu.1} parent=0
    #allocation2 [shape = 'u8[8192]{0}', space=vmem, size = 0x2000, scoped, tag = 'input window, operand 1, single buffered']
    #allocation3 [shape = 's32[1]{0}', space=sflag, size = 0x4, scoped, tag = 'scoped memory for linear_add_relu.1']
    #allocation4 [shape = 's32[1]{0}', space=sflag, size = 0x4, scoped, tag = 'scoped memory for linear_add_relu.1']
    #allocation5 [shape = 'u8[512]{0}', space=vmem, size = 0x400, scoped, tag = 'output window, operand 0, single buffered']
    %7 = vsyncpa [#allocation3], 0
    %8 = vsyncpa [#allocation4], 0
    // Predicated region
    $region2: #{linear_add_relu.1} parent=1 // pred_check
      _
    $region3: #{linear_add_relu.1} parent=1 // pred_check_branch
      %10 = sbr.rel (0) target = $region5
    $region4: #{linear_add_relu.1} parent=1 // pred_region
      _
    $region5: #{linear_add_relu.1} parent=1 // pred_fallthru
      _
    // Predicated region
    $region6: #{linear_add_relu.1} parent=1 // pred_check
      _
    $region7: #{linear_add_relu.1} parent=1 // pred_check_branch
      %12 = sbr.rel (0) target = $region9
    $region8: #{linear_add_relu.1} parent=1 // pred_region
      %s14 = ssub.s32 256, 256
      %15 = vsyncadd [#allocation3], %s14
      %s16 = sshll.u32 [#allocation2], 4
      %s17 = int_to_ptr.vmem [resolvable:$true] %s16
      %22 = dma.hbm_to_vmem [thread:$0]  %s1, 256, %s17, [#allocation3], 128, 128, 8
    $region9: #{linear_add_relu.1} parent=1 // pred_fallthru
      _
    // Predicated region
    $region10: #{linear_add_relu.1} parent=1 // pred_check
      _
    $region11: #{linear_add_relu.1} parent=1 // pred_check_branch
      %24 = sbr.rel (0) target = $region13
    $region12: #{linear_add_relu.1} parent=1 // pred_region
      %25 = dma.done [#allocation3], 256
    $region13: #{linear_add_relu.1} parent=1 // pred_fallthru
      _
    %v26 = vld [vmem:[%s0] sm:$0x1]
    %v27 = vld [vmem:[#allocation2] sm:$0xff]
    %v28 = vld [vmem:[#allocation2 + $0x8] sm:$0x7]
    %vm29 = vcmask 89088
    %v31 = vsel %vm29, %v26, 0
    %vm33 = vcmask 1042432
    %v35 = vsel %vm33, %v28, 0
    %37 = vmatprep.subr.mxu0 0.0
    %38 = vmatpush1.msra.mxu0 %v27
    %39 = vmatprep.subr.mxu0 0.0
    %40 = vmatpush1.msra.mxu0 %v35
    %41 = vmatprep.subr.mxu0 0.0
    %42 = vmatpush1.msra.mxu0 0.0
    %43 = vmatprep.subr.mxu0 0.0
    %44 = vmatpush1.msra.mxu0 0.0
    %45 = vmatprep.subr.mxu0 0.0
    %46 = vmatpush1.msra.mxu0 0.0
    %47 = vmatprep.subr.mxu0 0.0
    %48 = vmatpush1.msra.mxu0 0.0
    %49 = vmatprep.subr.mxu0 0.0
    %50 = vmatpush1.msra.mxu0 0.0
    %51 = vmatprep.subr.mxu0 0.0
    %52 = vmatpush1.msra.mxu0 0.0
    %53 = vmatprep.subr.mxu0 0.0
    %54 = vmatpush1.msra.mxu0 0.0
    %55 = vmatprep.subr.mxu0 0.0
    %56 = vmatpush1.msra.mxu0 0.0
    %57 = vmatprep.subr.mxu0 0.0
    %58 = vmatpush1.msra.mxu0 0.0
    %59 = vmatprep.subr.mxu0 0.0
    %60 = vmatpush1.msra.mxu0 0.0
    %61 = vmatprep.subr.mxu0 0.0
    %62 = vmatpush1.msra.mxu0 0.0
    %63 = vmatprep.subr.mxu0 0.0
    %64 = vmatpush1.msra.mxu0 0.0
    %65 = vmatprep.subr.mxu0 0.0
    %66 = vmatpush1.msra.mxu0 0.0
    %67 = vmatprep.subr.mxu0 0.0
    %68 = vmatpush1.msra.mxu0 0.0
    %69 = vmatprep.subr.mxu0 0.0
    %70 = vmatpush1.msra.mxu0 0.0
    %71 = vmatprep.subr.mxu0 0.0
    %72 = vmatpush1.msra.mxu0 0.0
    %73 = vmatprep.subr.mxu0 0.0
    %74 = vmatpush1.msra.mxu0 0.0
    %75 = vmatprep.subr.mxu0 0.0
    %76 = vmatpush1.msra.mxu0 0.0
    %77 = vmatprep.subr.mxu0 0.0
    %78 = vmatpush1.msra.mxu0 0.0
    %79 = vmatprep.subr.mxu0 0.0
    %80 = vmatpush1.msra.mxu0 0.0
    %81 = vmatprep.subr.mxu0 0.0
    %82 = vmatpush1.msra.mxu0 0.0
    %83 = vmatprep.subr.mxu0 0.0
    %84 = vmatpush1.msra.mxu0 0.0
    %85 = vmatprep.subr.mxu0 0.0
    %86 = vmatpush1.msra.mxu0 0.0
    %87 = vmatprep.subr.mxu0 0.0
    %88 = vmatpush1.msra.mxu0 0.0
    %89 = vmatprep.subr.mxu0 0.0
    %90 = vmatpush1.msra.mxu0 0.0
    %91 = vmatprep.subr.mxu0 0.0
    %92 = vmatpush1.msra.mxu0 0.0
    %93 = vmatprep.subr.mxu0 0.0
    %94 = vmatpush1.msra.mxu0 0.0
    %95 = vmatprep.subr.mxu0 0.0
    %96 = vmatpush1.msra.mxu0 0.0
    %97 = vmatprep.subr.mxu0 0.0
    %98 = vmatpush1.msra.mxu0 0.0
    %99 = vmatprep.subr.mxu0 0.0
    %100 = vmatpush1.msra.mxu0 0.0
    %101 = vmatprep.mubr.f32.mxu0 0.0
    %102 = vmatmul.mubr.f32.gmra.mrb[0].mxu0 %v31
    %v103 = vpop.f32.mrb[0].mxu0
    %v104 = vadd.f32 0.0, %v103
    %v105 = vpop.f32.mrb[0].mxu0
    %106 = vdwg.mxu0
    %v107 = vmax.f32 %v104, 0.0
    %108 = vst [vmem:[#allocation5] sm:$0x1] %v107
    // Predicated region
    $region14: #{linear_add_relu.1} parent=1 // pred_check
      _
    $region15: #{linear_add_relu.1} parent=1 // pred_check_branch
      %110 = sbr.rel (0) target = $region17
    $region16: #{linear_add_relu.1} parent=1 // pred_region
      %s112 = ssub.s32 16, 16
      %113 = vsyncadd [#allocation4], %s112
      %s115 = sshll.u32 [#allocation5], 4
      %s116 = int_to_ptr.vmem [resolvable:$true] %s115
      %118 = dma.vmem_to_hbm [thread:$0]  %s116, 16, %s2, [#allocation4]
    $region17: #{linear_add_relu.1} parent=1 // pred_fallthru
      _
    // Predicated region
    $region18: #{linear_add_relu.1} parent=1 // pred_check
      _
    $region19: #{linear_add_relu.1} parent=1 // pred_check_branch
      %120 = sbr.rel (0) target = $region21
    $region20: #{linear_add_relu.1} parent=1 // pred_region
      %121 = dma.done [#allocation4], 16
    $region21: #{linear_add_relu.1} parent=1 // pred_fallthru
      _
    %122 = vsyncpa [#allocation3], 1
    %123 = vsyncpa [#allocation4], 1

</llo_original>
